<compile_context>
chip_gen: v5e
topology: v5e:2x2
jax: 0.10.0
libtpu: 0.0.40
codegen_flags: <defaults>
</compile_context>

<pallas_src>
import jax
import jax.numpy as jnp
from jax.experimental import pallas as pl
from jax.experimental.pallas import tpu as pltpu


def _round_up(x, m):
    return ((x + m - 1) // m) * m


def _make_mlp_kernel(num_layers, use_bf16_activations):
    """Builds the fused-MLP kernel body for a fixed layer count / act dtype."""
    act_dtype = jnp.bfloat16 if use_bf16_activations else jnp.float32

    def kernel(x_ref, *refs):
        # refs = (W0, b0, W1, b1, ..., W_{L-1}, b_{L-1}, out_ref)
        # W_i : (out_i, in_i) torch-native orientation, b_i : (out_i, 1)
        # x_ref : (d_in, tile_n) ; out_ref : (d_out, tile_n)
        out_ref = refs[-1]
        param_refs = refs[:-1]

        x = x_ref[...].astype(jnp.float32)            # (d_in, tile)
        d_in = x.shape[0]

        # ---- First layer: K = d_in (tiny) -> VPU broadcast FMAs, skip MXU.
        w0 = param_refs[0][...].astype(jnp.float32)   # (h0, d_in)
        b0 = param_refs[1][...].astype(jnp.float32)   # (h0, 1)
        h = b0 + w0[:, 0:1] * x[0:1, :]               # (h0, tile)
        for j in range(1, d_in):
            h = h + w0[:, j:j + 1] * x[j:j + 1, :]
        if num_layers > 1:
            h = jnp.tanh(h.astype(act_dtype))

        # ---- Remaining layers: lane-dense matmuls, f32 accumulation.
        for i in range(1, num_layers):
            w = param_refs[2 * i][...]                      # (out_i, in_i)
            b = param_refs[2 * i + 1][...].astype(jnp.float32)
            h = jnp.dot(w.astype(h.dtype), h,
                        preferred_element_type=jnp.float32) + b
            if i < num_layers - 1:
                h = jnp.tanh(h.astype(act_dtype))

        out_ref[...] = h.astype(out_ref.dtype)

    return kernel


def helmholtz_pinn_forward(x, weights, biases, *, tile_n=16384,
                           use_bf16_activations=False,
                           vmem_limit_bytes=40 * 1024 * 1024):
    """Forward pass of HelmholtzPINN as a fused Pallas TPU kernel.

    x       : (N, layers[0]) float32   (public API matches the torch module)
    weights : list of (out_i, in_i) float32 arrays (torch-native orientation)
    biases  : list of (out_i,) float32 arrays
    returns : (N, layers[-1]) float32
    """
    num_layers = len(weights)
    n, d_in = x.shape
    d_out = weights[-1].shape[0]

    # ---- Tile selection.
    # Large tiles amortize the ~0.35 us / grid-step overhead (EUP work per
    # tile at 4096 points is of the same order), but keep at least 2 grid
    # steps whenever N allows it so v7x's two TensorCores both get work on
    # the ("parallel",) axis.  Tiles stay a multiple of 128 lanes.
    n_128 = _round_up(n, 128)
    tile = min(_round_up(tile_n, 128), n_128)
    if tile >= n_128 and n_128 >= 256:
        tile = _round_up(pl.cdiv(n_128, 2), 128)
    n_pad = _round_up(n, tile)

    # Points-on-lanes layout: one small XLA transpose+pad copy (~16 B/pt).
    # TODO(synk): accept x already in (d_in, N) layout upstream (or fuse the
    # transpose into the operand) to remove this extra HBM pass entirely.
    xt = jnp.pad(x.T, ((0, 0), (0, n_pad - n)))

    biases_2d = [b.reshape(-1, 1) for b in biases]          # (out_i, 1)

    in_specs = [pl.BlockSpec((d_in, tile), lambda i: (0, i))]
    params = []
    for w, b in zip(weights, biases_2d):
        # Full-array blocks with a constant index_map: weights stay resident.
        in_specs.append(pl.BlockSpec(w.shape, lambda i: (0, 0)))
        in_specs.append(pl.BlockSpec(b.shape, lambda i: (0, 0)))
        params.extend([w, b])

    out_spec = pl.BlockSpec((d_out, tile), lambda i: (0, i))

    # Advisory cost estimate: this body is EUP (tanh) bound, not MXU/HBM bound.
    hidden_units = sum(w.shape[0] for w in weights[:-1])
    flops = 2 * n_pad * sum(int(w.shape[0] * w.shape[1]) for w in weights)
    transcendentals = n_pad * hidden_units
    param_bytes = sum(int(p.size) * p.dtype.itemsize for p in params)
    bytes_accessed = int(xt.size) * 4 + n_pad * d_out * 4 + param_bytes
    cost = pl.CostEstimate(flops=flops,
                           transcendentals=transcendentals,
                           bytes_accessed=bytes_accessed)

    kernel = _make_mlp_kernel(num_layers, use_bf16_activations)

    out = pl.pallas_call(
        kernel,
        out_shape=jax.ShapeDtypeStruct((d_out, n_pad), jnp.float32),
        grid_spec=pltpu.PrefetchScalarGridSpec(
            num_scalar_prefetch=0,
            grid=(n_pad // tile,),
            in_specs=in_specs,
            out_specs=out_spec,
        ),
        compiler_params=pltpu.CompilerParams(
            dimension_semantics=("parallel",),
            vmem_limit_bytes=vmem_limit_bytes,
        ),
        cost_estimate=cost,
    )(xt, *params)

    # Back to the public (N, d_out) convention; drop padded points.
    return out[:, :n].T


def init_params(layers, key):
    """Xavier-normal weights in torch-native (out, in) orientation and zero
    biases, matching nn.init.xavier_normal_ / nn.init.zeros_."""
    weights, biases = [], []
    for i in range(len(layers) - 1):
        fan_in, fan_out = layers[i], layers[i + 1]
        key, sub = jax.random.split(key)
        std = (2.0 / (fan_in + fan_out)) ** 0.5
        w = std * jax.random.normal(sub, (fan_out, fan_in), dtype=jnp.float32)
        b = jnp.zeros((fan_out,), dtype=jnp.float32)
        weights.append(w)
        biases.append(b)
    return weights, biases


def reference_forward(x, weights, biases):
    """Plain-JAX reference of the torch forward pass (x @ W.T + b, tanh)."""
    h = x
    for i, (w, b) in enumerate(zip(weights, biases)):
        h = h @ w.T + b
        if i < len(weights) - 1:
            h = jnp.tanh(h)
    return h


if __name__ == "__main__":
    # Deterministic small example consistent with forward(): x has shape
    # (N, 2), output has shape (N, 1).  layers = [2, 32, 32, 1].
    layers = [2, 32, 32, 1]
    key = jax.random.PRNGKey(0)
    key, kx1, kx2 = jax.random.split(key, 3)
    weights, biases = init_params(layers, key)

    ok = True

    # Case 1: small N -> tile split keeps two grid steps.
    N1 = 256
    x1 = jax.random.uniform(kx1, (N1, layers[0]), dtype=jnp.float32,
                            minval=-1.0, maxval=1.0)
    out1 = jax.block_until_ready(helmholtz_pinn_forward(x1, weights, biases))
    ref1 = reference_forward(x1, weights, biases)
    ok &= out1.shape == (N1, layers[-1])
    ok &= bool(jnp.allclose(out1, ref1, atol=2e-5, rtol=1e-5))

    # Case 2: larger, non-multiple-of-tile N -> exercises padding + grid > 1.
    N2 = 5000
    x2 = jax.random.uniform(kx2, (N2, layers[0]), dtype=jnp.float32,
                            minval=-1.0, maxval=1.0)
    out2 = jax.block_until_ready(helmholtz_pinn_forward(x2, weights, biases))
    ref2 = reference_forward(x2, weights, biases)
    ok &= out2.shape == (N2, layers[-1])
    ok &= bool(jnp.allclose(out2, ref2, atol=2e-5, rtol=1e-5))

    # Case 3: optional bf16-activation variant (v6e/v7x EUP win); accuracy-
    # trading, so only a loose check.  Not recommended on v5e.
    out3 = jax.block_until_ready(
        helmholtz_pinn_forward(x2, weights, biases, use_bf16_activations=True))
    ok &= out3.shape == (N2, layers[-1])
    ok &= bool(jnp.allclose(out3, ref2, atol=1e-1))

    assert ok, "mismatch vs reference"

    # TODO(synk): loss_pde / loss_data / compute_loss need autodiff (2nd-order
    # grads, bessel_j0) through the network; they are training-time utilities,
    # not part of forward, so they are not translated to Pallas here.
    print("KERNEL_OK")
</pallas_src>

<mosaic_0001>
module attributes {stable_mosaic.version = 11 : i64} {
  func.func @kernel(%arg0: i32, %arg1: memref<2x128xf32, #tpu.memory_space<vmem>>, %arg2: memref<32x2xf32, #tpu.memory_space<vmem>>, %arg3: memref<32x1xf32, #tpu.memory_space<vmem>>, %arg4: memref<32x32xf32, #tpu.memory_space<vmem>>, %arg5: memref<32x1xf32, #tpu.memory_space<vmem>>, %arg6: memref<1x32xf32, #tpu.memory_space<vmem>>, %arg7: memref<1x1xf32, #tpu.memory_space<vmem>>, %arg8: memref<1x128xf32, #tpu.memory_space<vmem>>) attributes {dimension_semantics = [#tpu.dimension_semantics<parallel>], iteration_bounds = array<i64: 2>, scalar_prefetch = 0 : i64, scratch_operands = 0 : i64, tpu.core_type = #tpu.core_type<tc>, window_params = [{transform_indices = @transform_0, window_bounds = array<i64: 2, 128>}, {pipeline_mode = #tpu.pipeline_mode<synchronous>, transform_indices = @transform_1, window_bounds = array<i64: 32, 2>}, {pipeline_mode = #tpu.pipeline_mode<synchronous>, transform_indices = @transform_2, window_bounds = array<i64: 32, 1>}, {pipeline_mode = #tpu.pipeline_mode<synchronous>, transform_indices = @transform_3, window_bounds = array<i64: 32, 32>}, {pipeline_mode = #tpu.pipeline_mode<synchronous>, transform_indices = @transform_4, window_bounds = array<i64: 32, 1>}, {pipeline_mode = #tpu.pipeline_mode<synchronous>, transform_indices = @transform_5, window_bounds = array<i64: 1, 32>}, {pipeline_mode = #tpu.pipeline_mode<synchronous>, transform_indices = @transform_6, window_bounds = array<i64: 1, 1>}, {transform_indices = @transform_7, window_bounds = array<i64: 1, 128>}]} {
    %c0 = arith.constant 0 : index
    %c0_0 = arith.constant 0 : index
    %0 = vector.load %arg1[%c0, %c0_0] : memref<2x128xf32, #tpu.memory_space<vmem>>, vector<2x128xf32>
    %c0_1 = arith.constant 0 : index
    %c0_2 = arith.constant 0 : index
    %1 = vector.load %arg2[%c0_1, %c0_2] : memref<32x2xf32, #tpu.memory_space<vmem>>, vector<32x2xf32>
    %c0_3 = arith.constant 0 : index
    %c0_4 = arith.constant 0 : index
    %2 = vector.load %arg3[%c0_3, %c0_4] : memref<32x1xf32, #tpu.memory_space<vmem>>, vector<32x1xf32>
    %3 = vector.extract_strided_slice %1 {offsets = [0, 0], sizes = [32, 1], strides = [1, 1]} : vector<32x2xf32> to vector<32x1xf32>
    %4 = vector.extract_strided_slice %0 {offsets = [0, 0], sizes = [1, 128], strides = [1, 1]} : vector<2x128xf32> to vector<1x128xf32>
    %5 = vector.broadcast %3 : vector<32x1xf32> to vector<32x128xf32>
    %6 = vector.broadcast %4 : vector<1x128xf32> to vector<32x128xf32>
    %7 = arith.mulf %5, %6 : vector<32x128xf32>
    %8 = vector.broadcast %2 : vector<32x1xf32> to vector<32x128xf32>
    %9 = arith.addf %8, %7 : vector<32x128xf32>
    %10 = vector.extract_strided_slice %1 {offsets = [0, 1], sizes = [32, 1], strides = [1, 1]} : vector<32x2xf32> to vector<32x1xf32>
    %11 = vector.extract_strided_slice %0 {offsets = [1, 0], sizes = [1, 128], strides = [1, 1]} : vector<2x128xf32> to vector<1x128xf32>
    %12 = vector.broadcast %10 : vector<32x1xf32> to vector<32x128xf32>
    %13 = vector.broadcast %11 : vector<1x128xf32> to vector<32x128xf32>
    %14 = arith.mulf %12, %13 : vector<32x128xf32>
    %15 = arith.addf %9, %14 : vector<32x128xf32>
    %16 = math.tanh %15 : vector<32x128xf32>
    %c0_5 = arith.constant 0 : index
    %c0_6 = arith.constant 0 : index
    %17 = vector.load %arg4[%c0_5, %c0_6] : memref<32x32xf32, #tpu.memory_space<vmem>>, vector<32x32xf32>
    %c0_7 = arith.constant 0 : index
    %c0_8 = arith.constant 0 : index
    %18 = vector.load %arg5[%c0_7, %c0_8] : memref<32x1xf32, #tpu.memory_space<vmem>>, vector<32x1xf32>
    %cst = arith.constant dense<0.000000e+00> : vector<32x128xf32>
    %19 = tpu.matmul %17, %16, %cst {dimension_numbers = #tpu.dot_dimension_numbers<[1], [0], [0], [1], [0, 0, 1, 1], [], []>} : vector<32x32xf32>, vector<32x128xf32>, vector<32x128xf32> -> vector<32x128xf32>
    %20 = vector.broadcast %18 : vector<32x1xf32> to vector<32x128xf32>
    %21 = arith.addf %19, %20 : vector<32x128xf32>
    %22 = math.tanh %21 : vector<32x128xf32>
    %c0_9 = arith.constant 0 : index
    %c0_10 = arith.constant 0 : index
    %23 = vector.load %arg6[%c0_9, %c0_10] : memref<1x32xf32, #tpu.memory_space<vmem>>, vector<1x32xf32>
    %c0_11 = arith.constant 0 : index
    %c0_12 = arith.constant 0 : index
    %24 = vector.load %arg7[%c0_11, %c0_12] : memref<1x1xf32, #tpu.memory_space<vmem>>, vector<1x1xf32>
    %cst_13 = arith.constant dense<0.000000e+00> : vector<1x128xf32>
    %25 = tpu.matmul %23, %22, %cst_13 {dimension_numbers = #tpu.dot_dimension_numbers<[1], [0], [0], [1], [0, 0, 1, 1], [], []>} : vector<1x32xf32>, vector<32x128xf32>, vector<1x128xf32> -> vector<1x128xf32>
    %26 = vector.broadcast %24 : vector<1x1xf32> to vector<1x128xf32>
    %27 = arith.addf %25, %26 : vector<1x128xf32>
    %c0_14 = arith.constant 0 : index
    %c0_15 = arith.constant 0 : index
    %28 = vector.load %arg8[%c0_14, %c0_15] : memref<1x128xf32, #tpu.memory_space<vmem>>, vector<1x128xf32>
    tpu.vector_store %arg8[%c0_14, %c0_15], %27 {strides = array<i32>} : memref<1x128xf32, #tpu.memory_space<vmem>>, vector<1x128xf32>,
    return
  }
  func.func @transform_0(%arg0: i32) -> (i32, i32) {
    %c0_i32 = arith.constant 0 : i32
    %c0_i32_0 = arith.constant 0 : i32
    return %c0_i32, %arg0 : i32, i32
  }
  func.func @transform_1(%arg0: i32) -> (i32, i32) {
    %c0_i32 = arith.constant 0 : i32
    %c0_i32_0 = arith.constant 0 : i32
    %c0_i32_1 = arith.constant 0 : i32
    return %c0_i32, %c0_i32_0 : i32, i32
  }
  func.func @transform_2(%arg0: i32) -> (i32, i32) {
    %c0_i32 = arith.constant 0 : i32
    %c0_i32_0 = arith.constant 0 : i32
    %c0_i32_1 = arith.constant 0 : i32
    return %c0_i32, %c0_i32_0 : i32, i32
  }
  func.func @transform_3(%arg0: i32) -> (i32, i32) {
    %c0_i32 = arith.constant 0 : i32
    %c0_i32_0 = arith.constant 0 : i32
    %c0_i32_1 = arith.constant 0 : i32
    return %c0_i32, %c0_i32_0 : i32, i32
  }
  func.func @transform_4(%arg0: i32) -> (i32, i32) {
    %c0_i32 = arith.constant 0 : i32
    %c0_i32_0 = arith.constant 0 : i32
    %c0_i32_1 = arith.constant 0 : i32
    return %c0_i32, %c0_i32_0 : i32, i32
  }
  func.func @transform_5(%arg0: i32) -> (i32, i32) {
    %c0_i32 = arith.constant 0 : i32
    %c0_i32_0 = arith.constant 0 : i32
    %c0_i32_1 = arith.constant 0 : i32
    return %c0_i32, %c0_i32_0 : i32, i32
  }
  func.func @transform_6(%arg0: i32) -> (i32, i32) {
    %c0_i32 = arith.constant 0 : i32
    %c0_i32_0 = arith.constant 0 : i32
    %c0_i32_1 = arith.constant 0 : i32
    return %c0_i32, %c0_i32_0 : i32, i32
  }
  func.func @transform_7(%arg0: i32) -> (i32, i32) {
    %c0_i32 = arith.constant 0 : i32
    %c0_i32_0 = arith.constant 0 : i32
    return %c0_i32, %arg0 : i32, i32
  }
}

</mosaic_0001>

<llo_original>
// kernel: tpu_custom_call.1
$region0: #{tpu_custom_call.1}
  #allocation0 [shape = 'u32[]', space=smem, size = 0x4, offset = 0x4, fixed_abs, tag = 'smem constant byte address 0x4 - core index']
  #allocation1 [shape = 'u32[72,128]{1,0:T(1,128)}', space=vmem, size = 0x9000, scoped, tag = 'internal scratch']
  #allocation2 [shape = 'f32[1,1]{1,0:T(1,128)S(1)}', space=vmem, size = 0x200, scoped, tag = 'scoped memory for tpu_custom_call.1']
  %s0 = inlined_call_operand.vmem [shape: f32[2,256], index: 0, kind: input, shape index: {}]
  %s1 = inlined_call_operand.vmem [shape: f32[32,2], index: 1, kind: input, shape index: {}]
  %s2 = inlined_call_operand.vmem [shape: f32[32,1], index: 2, kind: input, shape index: {}]
  %s3 = inlined_call_operand.vmem [shape: f32[32,32], index: 3, kind: input, shape index: {}]
  %s4 = inlined_call_operand.vmem [shape: f32[32,1], index: 4, kind: input, shape index: {}]
  %s5 = inlined_call_operand.vmem [shape: f32[1,32], index: 5, kind: input, shape index: {}]
  %s6 = inlined_call_operand.<no memory space> [shape: f32[1,1], index: 6, kind: input, shape index: {}]
  %s7 = inlined_call_operand.hbm [shape: f32[1,256], index: 7, kind: output, shape index: {}]
  %s8 = sld [smem:[#allocation0]]
  $region61: #{tpu_custom_call.1} parent=0
    _
  %s10 = ssub.s32 1, %s8
  %s11 = scalar_select 0, %s10, %s8
  %v12 = vstv %s6
  %13 = vst [vmem:[#allocation2] sm:$0x1] %v12
  $region1: #{tpu_custom_call.1} parent=0
    #allocation3 [shape = 'u8[1024]{0}', space=vmem, size = 0x400, scoped, tag = 'output window, operand 0']
    #allocation4 [shape = 's32[2]{0}', space=sflag, size = 0x8, scoped, tag = 'scoped memory for tpu_custom_call.1']
    %14 = vsyncpa [#allocation4], 0
    %s15 = scalar_lea.sflag [#allocation4], 1
    %16 = vsyncpa %s15, 0
    loop: start=0, step=1, limit=4
    $region2: #{tpu_custom_call.1} parent=1 // loop_pre_header
      _
    $region3: #{tpu_custom_call.1} parent=1 // loop_header
      %s18 = sphi 0, %s22
      %p19 = scmp.ge.s32.totalorder %s18, 4
      %s28 = sphi 0, %s30
      %s31 = sphi 0, %s28
      %s32 = sphi 0, %s31
      %s48 = sphi 0, %s32
      %s52 = sphi 0, %s52
      %s54 = sphi 0, %s52
      %s55 = sphi 0, %s54
      %s69 = sphi 0, %s55
      %s73 = sphi 0, %s73
      %s75 = sphi 0, %s73
      %s76 = sphi 0, %s75
      %s90 = sphi 0, %s76
      %s94 = sphi 0, %s94
      %s96 = sphi 0, %s94
      %s97 = sphi 0, %s96
      %s111 = sphi 0, %s97
      %s115 = sphi 0, %s115
      %s117 = sphi 0, %s115
      %s118 = sphi 0, %s117
      %s132 = sphi 0, %s118
      %s136 = sphi 0, %s136
      %s138 = sphi 0, %s136
      %s139 = sphi 0, %s138
      %s153 = sphi 0, %s139
      %s157 = sphi 0, %s157
      %s159 = sphi 0, %s157
      %s160 = sphi 0, %s159
      %s174 = sphi 0, %s160
      %s180 = sphi 0, %s182
      %s183 = sphi 0, %s180
      %s184 = sphi 0, %s183
      %s200 = sphi 0, %s184
    $region4: #{tpu_custom_call.1} parent=1 // loop_header_branch
      %21 = sbr.rel (%p19) target = $region8
    $region5: #{tpu_custom_call.1} parent=1 // loop_body
      %s23 = ssub.s32 %s18, 1
      %s24 = ssub.s32 %s18, 2
      %s25 = sadd.s32 %s18, 1
      %s26 = ssub.s32 %s18, %s25
      %p27 = scmp.eq.s32.totalorder %s26, 0
      %s29 = sadd.s32 %s28, 1
      %s30 = scalar_select %p27, %s28, %s29
      %p33 = pneg %p27
      %p34 = scmp.eq.s32.totalorder %s18, 1
      %p35 = por %p33, %p34
      %p36 = scmp.ne.s32.totalorder %s28, %s31
      %p37 = scmp.eq.s32.totalorder %s18, 0
      %p38 = por %p36, %p37
      %p39 = scmp.ne.s32.totalorder %s28, %s31
      %p40 = scmp.eq.s32.totalorder %s23, 1
      %p41 = por %p39, %p40
      %p42 = scmp.ne.s32.totalorder %s31, %s32
      %p43 = scmp.eq.s32.totalorder %s23, 0
      %p44 = por %p42, %p43
      %p45 = scmp.ne.s32.totalorder %s31, %s32
      %p46 = scmp.eq.s32.totalorder %s24, 1
      %p47 = por %p45, %p46
      %p49 = scmp.ne.s32.totalorder %s32, %s48
      %p50 = scmp.eq.s32.totalorder %s24, 0
      %p51 = por %p49, %p50
      %s53 = sadd.s32 %s52, 1
      %p56 = scmp.eq.s32.totalorder %s18, 1
      %p57 = scmp.ne.s32.totalorder %s52, %s54
      %p58 = scmp.eq.s32.totalorder %s18, 0
      %p59 = por %p57, %p58
      %p60 = scmp.ne.s32.totalorder %s52, %s54
      %p61 = scmp.eq.s32.totalorder %s23, 1
      %p62 = por %p60, %p61
      %p63 = scmp.ne.s32.totalorder %s54, %s55
      %p64 = scmp.eq.s32.totalorder %s23, 0
      %p65 = por %p63, %p64
      %p66 = scmp.ne.s32.totalorder %s54, %s55
      %p67 = scmp.eq.s32.totalorder %s24, 1
      %p68 = por %p66, %p67
      %p70 = scmp.ne.s32.totalorder %s55, %s69
      %p71 = scmp.eq.s32.totalorder %s24, 0
      %p72 = por %p70, %p71
      %s74 = sadd.s32 %s73, 1
      %p77 = scmp.eq.s32.totalorder %s18, 1
      %p78 = scmp.ne.s32.totalorder %s73, %s75
      %p79 = scmp.eq.s32.totalorder %s18, 0
      %p80 = por %p78, %p79
      %p81 = scmp.ne.s32.totalorder %s73, %s75
      %p82 = scmp.eq.s32.totalorder %s23, 1
      %p83 = por %p81, %p82
      %p84 = scmp.ne.s32.totalorder %s75, %s76
      %p85 = scmp.eq.s32.totalorder %s23, 0
      %p86 = por %p84, %p85
      %p87 = scmp.ne.s32.totalorder %s75, %s76
      %p88 = scmp.eq.s32.totalorder %s24, 1
      %p89 = por %p87, %p88
      %p91 = scmp.ne.s32.totalorder %s76, %s90
      %p92 = scmp.eq.s32.totalorder %s24, 0
      %p93 = por %p91, %p92
      %s95 = sadd.s32 %s94, 1
      %p98 = scmp.eq.s32.totalorder %s18, 1
      %p99 = scmp.ne.s32.totalorder %s94, %s96
      %p100 = scmp.eq.s32.totalorder %s18, 0
      %p101 = por %p99, %p100
      %p102 = scmp.ne.s32.totalorder %s94, %s96
      %p103 = scmp.eq.s32.totalorder %s23, 1
      %p104 = por %p102, %p103
      %p105 = scmp.ne.s32.totalorder %s96, %s97
      %p106 = scmp.eq.s32.totalorder %s23, 0
      %p107 = por %p105, %p106
      %p108 = scmp.ne.s32.totalorder %s96, %s97
      %p109 = scmp.eq.s32.totalorder %s24, 1
      %p110 = por %p108, %p109
      %p112 = scmp.ne.s32.totalorder %s97, %s111
      %p113 = scmp.eq.s32.totalorder %s24, 0
      %p114 = por %p112, %p113
      %s116 = sadd.s32 %s115, 1
      %p119 = scmp.eq.s32.totalorder %s18, 1
      %p120 = scmp.ne.s32.totalorder %s115, %s117
      %p121 = scmp.eq.s32.totalorder %s18, 0
      %p122 = por %p120, %p121
      %p123 = scmp.ne.s32.totalorder %s115, %s117
      %p124 = scmp.eq.s32.totalorder %s23, 1
      %p125 = por %p123, %p124
      %p126 = scmp.ne.s32.totalorder %s117, %s118
      %p127 = scmp.eq.s32.totalorder %s23, 0
      %p128 = por %p126, %p127
      %p129 = scmp.ne.s32.totalorder %s117, %s118
      %p130 = scmp.eq.s32.totalorder %s24, 1
      %p131 = por %p129, %p130
      %p133 = scmp.ne.s32.totalorder %s118, %s132
      %p134 = scmp.eq.s32.totalorder %s24, 0
      %p135 = por %p133, %p134
      %s137 = sadd.s32 %s136, 1
      %p140 = scmp.eq.s32.totalorder %s18, 1
      %p141 = scmp.ne.s32.totalorder %s136, %s138
      %p142 = scmp.eq.s32.totalorder %s18, 0
      %p143 = por %p141, %p142
      %p144 = scmp.ne.s32.totalorder %s136, %s138
      %p145 = scmp.eq.s32.totalorder %s23, 1
      %p146 = por %p144, %p145
      %p147 = scmp.ne.s32.totalorder %s138, %s139
      %p148 = scmp.eq.s32.totalorder %s23, 0
      %p149 = por %p147, %p148
      %p150 = scmp.ne.s32.totalorder %s138, %s139
      %p151 = scmp.eq.s32.totalorder %s24, 1
      %p152 = por %p150, %p151
      %p154 = scmp.ne.s32.totalorder %s139, %s153
      %p155 = scmp.eq.s32.totalorder %s24, 0
      %p156 = por %p154, %p155
      %s158 = sadd.s32 %s157, 1
      %p161 = scmp.eq.s32.totalorder %s18, 1
      %p162 = scmp.ne.s32.totalorder %s157, %s159
      %p163 = scmp.eq.s32.totalorder %s18, 0
      %p164 = por %p162, %p163
      %p165 = scmp.ne.s32.totalorder %s157, %s159
      %p166 = scmp.eq.s32.totalorder %s23, 1
      %p167 = por %p165, %p166
      %p168 = scmp.ne.s32.totalorder %s159, %s160
      %p169 = scmp.eq.s32.totalorder %s23, 0
      %p170 = por %p168, %p169
      %p171 = scmp.ne.s32.totalorder %s159, %s160
      %p172 = scmp.eq.s32.totalorder %s24, 1
      %p173 = por %p171, %p172
      %p175 = scmp.ne.s32.totalorder %s160, %s174
      %p176 = scmp.eq.s32.totalorder %s24, 0
      %p177 = por %p175, %p176
      %s178 = ssub.s32 %s18, %s25
      %p179 = scmp.eq.s32.totalorder %s178, 0
      %s181 = sadd.s32 %s180, 1
      %s182 = scalar_select %p179, %s180, %s181
      %p185 = pneg %p179
      %p186 = scmp.eq.s32.totalorder %s18, 1
      %p187 = por %p185, %p186
      %p188 = scmp.ne.s32.totalorder %s180, %s183
      %p189 = scmp.eq.s32.totalorder %s18, 0
      %p190 = por %p188, %p189
      %p191 = scmp.ne.s32.totalorder %s180, %s183
      %p192 = scmp.eq.s32.totalorder %s23, 1
      %p193 = por %p191, %p192
      %p194 = scmp.ne.s32.totalorder %s183, %s184
      %p195 = scmp.eq.s32.totalorder %s23, 0
      %p196 = por %p194, %p195
      %p197 = scmp.ne.s32.totalorder %s183, %s184
      %p198 = scmp.eq.s32.totalorder %s24, 1
      %p199 = por %p197, %p198
      %p201 = scmp.ne.s32.totalorder %s184, %s200
      %p202 = scmp.eq.s32.totalorder %s24, 0
      %p203 = por %p201, %p202
      %p204 = scmp.le.s32.totalorder 1, %s18
      %p205 = scmp.lt.s32.totalorder %s18, 3
      %p206 = pnand %p204, %p205
      %p207 = pneg %p206
      // Predicated region
      $region9: #{tpu_custom_call.1} parent=5 // pred_check
        _
      $region10: #{tpu_custom_call.1} parent=5 // pred_check_branch
        %209 = sbr.rel (%p206) target = $region12
      $region11: #{tpu_custom_call.1} parent=5 // pred_region
        %s210 = ssub.s32 %s18, 1
        // Predicated region
        $region13: #{tpu_custom_call.1} parent=11 // pred_check
          %p211 = pneg %p65
        $region14: #{tpu_custom_call.1} parent=11 // pred_check_branch
          %213 = sbr.rel (%p211) target = $region16
        $region15: #{tpu_custom_call.1} parent=11 // pred_region
          _
        $region16: #{tpu_custom_call.1} parent=11 // pred_fallthru
          _
        // Predicated region
        $region17: #{tpu_custom_call.1} parent=11 // pred_check
          %p214 = pneg %p86
        $region18: #{tpu_custom_call.1} parent=11 // pred_check_branch
          %216 = sbr.rel (%p214) target = $region20
        $region19: #{tpu_custom_call.1} parent=11 // pred_region
          _
        $region20: #{tpu_custom_call.1} parent=11 // pred_fallthru
          _
        // Predicated region
        $region21: #{tpu_custom_call.1} parent=11 // pred_check
          %p217 = pneg %p107
        $region22: #{tpu_custom_call.1} parent=11 // pred_check_branch
          %219 = sbr.rel (%p217) target = $region24
        $region23: #{tpu_custom_call.1} parent=11 // pred_region
          _
        $region24: #{tpu_custom_call.1} parent=11 // pred_fallthru
          _
        // Predicated region
        $region25: #{tpu_custom_call.1} parent=11 // pred_check
          %p220 = pneg %p128
        $region26: #{tpu_custom_call.1} parent=11 // pred_check_branch
          %222 = sbr.rel (%p220) target = $region28
        $region27: #{tpu_custom_call.1} parent=11 // pred_region
          _
        $region28: #{tpu_custom_call.1} parent=11 // pred_fallthru
          _
        // Predicated region
        $region29: #{tpu_custom_call.1} parent=11 // pred_check
          %p223 = pneg %p149
        $region30: #{tpu_custom_call.1} parent=11 // pred_check_branch
          %225 = sbr.rel (%p223) target = $region32
        $region31: #{tpu_custom_call.1} parent=11 // pred_region
          _
        $region32: #{tpu_custom_call.1} parent=11 // pred_fallthru
          _
        // Predicated region
        $region33: #{tpu_custom_call.1} parent=11 // pred_check
          %p226 = pneg %p170
        $region34: #{tpu_custom_call.1} parent=11 // pred_check_branch
          %228 = sbr.rel (%p226) target = $region36
        $region35: #{tpu_custom_call.1} parent=11 // pred_region
          _
        $region36: #{tpu_custom_call.1} parent=11 // pred_fallthru
          _
      $region12: #{tpu_custom_call.1} parent=5 // pred_fallthru
        _
      %p229 = scmp.lt.s32.totalorder %s18, 2
      // Predicated region
      $region37: #{tpu_custom_call.1} parent=5 // pred_check
        %p230 = pneg %p229
      $region38: #{tpu_custom_call.1} parent=5 // pred_check_branch
        %232 = sbr.rel (%p230) target = $region40
      $region39: #{tpu_custom_call.1} parent=5 // pred_region
        // Predicated region
        $region41: #{tpu_custom_call.1} parent=39 // pred_check
          %p233 = pneg %p38
        $region42: #{tpu_custom_call.1} parent=39 // pred_check_branch
          %235 = sbr.rel (%p233) target = $region44
        $region43: #{tpu_custom_call.1} parent=39 // pred_region
          %p236 = scmp.lt.s32.totalorder %s18, 1
          %s237 = scalar_select %p236, %s18, 1
          %s238 = smul.addr %s237, 2
          %s239 = scalar_lea.vmem %s0, %s238
        $region44: #{tpu_custom_call.1} parent=39 // pred_fallthru
          _
      $region40: #{tpu_custom_call.1} parent=5 // pred_fallthru
        _
      %p240 = scmp.le.s32.totalorder 1, %s18
      %p241 = scmp.lt.s32.totalorder %s18, 3
      %p242 = pnand %p240, %p241
      %p243 = pneg %p242
      // Predicated region
      $region45: #{tpu_custom_call.1} parent=5 // pred_check
        _
      $region46: #{tpu_custom_call.1} parent=5 // pred_check_branch
        %245 = sbr.rel (%p242) target = $region48
      $region47: #{tpu_custom_call.1} parent=5 // pred_region
        %s246 = ssub.s32 %s18, 1
        %p247 = scmp.lt.s32.totalorder %s23, 1
        %s248 = scalar_select %p247, %s23, 1
        %s249 = smul.addr %s248, 2
        %s250 = scalar_lea.vmem %s0, %s249
        %p251 = pneg %p44
        %p252 = pneg %p41
        %p253 = pneg %p65
        %p254 = pneg %p62
        %p255 = pneg %p86
        %p256 = pneg %p83
        %p257 = pneg %p107
        %p258 = pneg %p104
        %p259 = pneg %p128
        %p260 = pneg %p125
        %p261 = pneg %p149
        %p262 = pneg %p146
        %p263 = pneg %p170
        %p264 = pneg %p167
        %p265 = pneg %p196
        %p266 = pneg %p193
        %s267 = sand.u32 %s183, 1
        %s268 = scalar_lea.sflag [#allocation4], %s267
        %s269 = sand.u32 %s183, 1
        %s270 = scalar_lea.vmem [#allocation3], %s269
        %p271 = scmp.lt.s32.totalorder %s23, 1
        %s272 = scalar_select %p271, %s23, 1
        %s273 = smul.addr %s272, 2
        %s274 = scalar_lea.vmem %s0, %s273
        %v275 = vld [vmem:[%s274] sm:$0x3]
        %v276 = vld [vmem:[%s1] sm:$0xff]
        %v277 = vld [vmem:[%s1 + $0x8] sm:$0xff]
        %v278 = vld [vmem:[%s1 + $0x10] sm:$0xff]
        %v279 = vld [vmem:[%s1 + $0x18] sm:$0xff]
        %v280 = vld [vmem:[%s2] sm:$0xff]
        %v281 = vld [vmem:[%s2 + $0x8] sm:$0xff]
        %v282 = vld [vmem:[%s2 + $0x10] sm:$0xff]
        %v283 = vld [vmem:[%s2 + $0x18] sm:$0xff]
        %285 = vset.pattern.permute.xlu0 0
        %286 = vperm.xlu0 %285, %v276
        %v287 = vpop.permute.xlu0 %286
        %290 = vset.pattern.permute.xlu0 0
        %291 = vperm.xlu0 %290, %v277
        %v292 = vpop.permute.xlu0 %291
        %295 = vset.pattern.permute.xlu0 0
        %296 = vperm.xlu0 %295, %v278
        %v297 = vpop.permute.xlu0 %296
        %300 = vset.pattern.permute.xlu0 0
        %301 = vperm.xlu0 %300, %v279
        %v302 = vpop.permute.xlu0 %301
        %v304 = vperm.slane %v275, 0
        %v305 = vmul.f32 %v287, %v304
        %v306 = vmul.f32 %v292, %v304
        %v307 = vmul.f32 %v297, %v304
        %v308 = vmul.f32 %v302, %v304
        %310 = vset.pattern.permute.xlu0 0
        %311 = vperm.xlu0 %310, %v280
        %v312 = vpop.permute.xlu0 %311
        %315 = vset.pattern.permute.xlu0 0
        %316 = vperm.xlu0 %315, %v281
        %v317 = vpop.permute.xlu0 %316
        %320 = vset.pattern.permute.xlu0 0
        %321 = vperm.xlu0 %320, %v282
        %v322 = vpop.permute.xlu0 %321
        %325 = vset.pattern.permute.xlu0 0
        %326 = vperm.xlu0 %325, %v283
        %v327 = vpop.permute.xlu0 %326
        %v329 = vadd.f32 %v312, %v305
        %v330 = vadd.f32 %v317, %v306
        %v331 = vadd.f32 %v322, %v307
        %v332 = vadd.f32 %v327, %v308
        %333 = vset.pattern.permute.xlu0 1
        %334 = vperm.xlu0 %333, %v276
        %v335 = vpop.permute.xlu0 %334
        %337 = vset.pattern.permute.xlu0 1
        %338 = vperm.xlu0 %337, %v277
        %v339 = vpop.permute.xlu0 %338
        %341 = vset.pattern.permute.xlu0 1
        %342 = vperm.xlu0 %341, %v278
        %v343 = vpop.permute.xlu0 %342
        %345 = vset.pattern.permute.xlu0 1
        %346 = vperm.xlu0 %345, %v279
        %v347 = vpop.permute.xlu0 %346
        %v349 = vperm.slane %v275, 1
        %v350 = vmul.f32 %v335, %v349
        %v351 = vmul.f32 %v339, %v349
        %v352 = vmul.f32 %v343, %v349
        %v353 = vmul.f32 %v347, %v349
        %v354 = vadd.f32 %v329, %v350
        %v355 = vadd.f32 %v330, %v351
        %v356 = vadd.f32 %v331, %v352
        %v357 = vadd.f32 %v332, %v353
        %v358 = vtanh.pop %v354
        %v359 = vtanh.pop %v355
        %v360 = vtanh.pop %v356
        %v361 = vtanh.pop %v357
        %v362 = vld [vmem:[%s3] sm:$0xff]
        %v363 = vld [vmem:[%s3 + $0x8] sm:$0xff]
        %v364 = vld [vmem:[%s3 + $0x10] sm:$0xff]
        %v365 = vld [vmem:[%s3 + $0x18] sm:$0xff]
        %v366 = vld [vmem:[%s4] sm:$0xff]
        %v367 = vld [vmem:[%s4 + $0x8] sm:$0xff]
        %v368 = vld [vmem:[%s4 + $0x10] sm:$0xff]
        %v369 = vld [vmem:[%s4 + $0x18] sm:$0xff]
        %371 = vset.pattern.permute.xlu0 0
        %372 = vperm.xlu0 %371, %v366
        %v373 = vpop.permute.xlu0 %372
        %376 = vset.pattern.permute.xlu0 0
        %377 = vperm.xlu0 %376, %v367
        %v378 = vpop.permute.xlu0 %377
        %381 = vset.pattern.permute.xlu0 0
        %382 = vperm.xlu0 %381, %v368
        %v383 = vpop.permute.xlu0 %382
        %386 = vset.pattern.permute.xlu0 0
        %387 = vperm.xlu0 %386, %v369
        %v388 = vpop.permute.xlu0 %387
        %vm390 = vcmask 261120
        %v392 = vsel %vm390, %v362, 0
        %v395 = vsel %vm390, %v363, 0
        %v398 = vsel %vm390, %v364, 0
        %v401 = vsel %vm390, %v365, 0
        %403 = vmatpush.msra.mxu0 0.0
        %404 = vmatpush.msra.mxu0 0.0
        %405 = vmatpush.msra.mxu0 0.0
        %406 = vmatpush.msra.mxu0 0.0
        %407 = vmatpush.msra.mxu0 0.0
        %408 = vmatpush.msra.mxu0 0.0
        %409 = vmatpush.msra.mxu0 0.0
        %410 = vmatpush.msra.mxu0 0.0
        %411 = vmatpush.msra.mxu0 0.0
        %412 = vmatpush.msra.mxu0 0.0
        %413 = vmatpush.msra.mxu0 0.0
        %414 = vmatpush.msra.mxu0 0.0
        %415 = vmatpush.msra.mxu0 %v361
        %416 = vmatpush.msra.mxu0 %v360
        %417 = vmatpush.msra.mxu0 %v359
        %418 = vmatpush.msra.mxu0 %v358
        %419 = vmatmul.f32.gmra.mxu0 %v392
        %v420 = vpop.f32.mrf.mxu0
        %v421 = vadd.f32 %v373, %v420
        %422 = vmatmul.f32.gmra.mxu0 %v395
        %v423 = vpop.f32.mrf.mxu0
        %v424 = vadd.f32 %v378, %v423
        %425 = vmatmul.f32.gmra.mxu0 %v398
        %v426 = vpop.f32.mrf.mxu0
        %v427 = vadd.f32 %v383, %v426
        %428 = vmatmul.f32.gmra.mxu0 %v401
        %v429 = vpop.f32.mrf.mxu0
        %v430 = vadd.f32 %v388, %v429
        %431 = vdwg.mxu0
        %v432 = vtanh.pop %v421
        %v433 = vtanh.pop %v424
        %v434 = vtanh.pop %v427
        %v435 = vtanh.pop %v430
        %v436 = vld [vmem:[%s5] sm:$0x1]
        %v437 = vld [vmem:[#allocation2] sm:$0x1]
        %439 = vset.pattern.permute.xlu0 0
        %440 = vperm.xlu0 %439, %v437
        %v441 = vpop.permute.xlu0 %440
        %v443 = vperm.slane %v441, 0
        %v445 = vsel %vm390, %v436, 0
        %447 = vmatpush.msra.mxu0 0.0
        %448 = vmatpush.msra.mxu0 0.0
        %449 = vmatpush.msra.mxu0 0.0
        %450 = vmatpush.msra.mxu0 0.0
        %451 = vmatpush.msra.mxu0 0.0
        %452 = vmatpush.msra.mxu0 0.0
        %453 = vmatpush.msra.mxu0 0.0
        %454 = vmatpush.msra.mxu0 0.0
        %455 = vmatpush.msra.mxu0 0.0
        %456 = vmatpush.msra.mxu0 0.0
        %457 = vmatpush.msra.mxu0 0.0
        %458 = vmatpush.msra.mxu0 0.0
        %459 = vmatpush.msra.mxu0 %v435
        %460 = vmatpush.msra.mxu0 %v434
        %461 = vmatpush.msra.mxu0 %v433
        %462 = vmatpush.msra.mxu0 %v432
        %463 = vmatmul.f32.gmra.mxu0 %v445
        %v464 = vpop.f32.mrf.mxu0
        %v465 = vadd.f32 %v443, %v464
        %466 = vdwg.mxu0
        %467 = vst [vmem:[%s270] sm:$0x1] %v465
        %s468 = sand.u32 %s183, 1
        %s469 = scalar_lea.sflag [#allocation4], %s468
        %s470 = sand.u32 %s183, 1
        %s471 = scalar_lea.vmem [#allocation3], %s470
        // Predicated region
        $region49: #{tpu_custom_call.1} parent=47 // pred_check
          %p472 = pneg %p193
        $region50: #{tpu_custom_call.1} parent=47 // pred_check_branch
          %474 = sbr.rel (%p472) target = $region52
        $region51: #{tpu_custom_call.1} parent=47 // pred_region
          %476 = vsyncadd %s469, 0
          %s477 = scalar_lea.hbm %s7, %s23
          %s479 = sshll.u32 %s471, 4
          %s480 = int_to_ptr.vmem [resolvable:$true] %s479
          %s481 = sshll.u32 %s477, 4
          %s482 = int_to_ptr.hbm [resolvable:$true] %s481
          %484 = dma.vmem_to_hbm [thread:$0]  %s480, 16, %s482, %s469
        $region52: #{tpu_custom_call.1} parent=47 // pred_fallthru
          _
      $region48: #{tpu_custom_call.1} parent=5 // pred_fallthru
        _
      %p485 = scmp.le.s32.totalorder 2, %s18
      // Predicated region
      $region53: #{tpu_custom_call.1} parent=5 // pred_check
        %p486 = pneg %p485
      $region54: #{tpu_custom_call.1} parent=5 // pred_check_branch
        %488 = sbr.rel (%p486) target = $region56
      $region55: #{tpu_custom_call.1} parent=5 // pred_region
        %s489 = ssub.s32 %s18, 2
        // Predicated region
        $region57: #{tpu_custom_call.1} parent=55 // pred_check
          %p490 = pneg %p199
        $region58: #{tpu_custom_call.1} parent=55 // pred_check_branch
          %492 = sbr.rel (%p490) target = $region60
        $region59: #{tpu_custom_call.1} parent=55 // pred_region
          %s493 = sand.u32 %s184, 1
          %s494 = scalar_lea.sflag [#allocation4], %s493
          %s495 = sand.u32 %s184, 1
          %s496 = scalar_lea.vmem [#allocation3], %s495
          %498 = dma.done %s494, 16
        $region60: #{tpu_custom_call.1} parent=55 // pred_fallthru
          _
      $region56: #{tpu_custom_call.1} parent=5 // pred_fallthru
        _
    $region6: #{tpu_custom_call.1} parent=1 // loop_footer
      %s22 = sadd.s32 1, %s18
    $region7: #{tpu_custom_call.1} parent=1 // loop_footer_branch
      %17 = sbr.rel target = $region3
    $region8: #{tpu_custom_call.1} parent=1 // loop_exit
      _
    %499 = vsyncpa [#allocation4], 1
    %s500 = scalar_lea.sflag [#allocation4], 1
    %501 = vsyncpa %s500, 1

</llo_original>
